<compile_context>
chip_gen: v7x
topology: tpu7x:2x2x1
jax: 0.10.0
libtpu: 0.0.40
codegen_flags: <defaults>
</compile_context>

<pallas_src>
import jax
import jax.numpy as jnp
from jax.experimental import pallas as pl
from jax.experimental.pallas import tpu as pltpu


# ---------------------------------------------------------------------------
# Kernel: one lane-tile of y = w0*x0 + w1*x1 + b   (VPU only, no MXU)
# ---------------------------------------------------------------------------
def _make_linear_kernel(num_features):
    def _linear_kernel(x_ref, w_ref, b_ref, o_ref):
        # x_ref: (8, TN) VMEM  -- rows [0, num_features) are real features
        # w_ref: (num_features,) SMEM
        # b_ref: (1,) SMEM
        # o_ref: (1, TN) VMEM  -- lane-dense output
        acc = w_ref[0] * x_ref[0:1, :]
        for f in range(1, num_features):
            acc = acc + w_ref[f] * x_ref[f:f + 1, :]
        o_ref[...] = acc + b_ref[0]

    return _linear_kernel


# ---------------------------------------------------------------------------
# Wrapper
# ---------------------------------------------------------------------------
def svm_forward(x, weight, bias, *, max_tile_n=32768):
    """Equivalent of SVM_model.forward: y = x @ weight.T + bias.

    x:      [N, 2] float32
    weight: [1, 2] float32   (nn.Linear(2, 1).weight)
    bias:   [1]    float32   (nn.Linear(2, 1).bias)
    returns [N, 1] float32
    """
    n, in_f = x.shape
    out_f = weight.shape[0]
    assert out_f == 1 and in_f <= 8, "kernel specialized for Linear(<=8, 1)"

    lane = 128
    sub = 8

    # Lane tile: as large as possible (amortize grid-step overhead), capped so
    # the double-buffered x block stays ~2 MiB (fits every generation's VMEM).
    n_128 = ((n + lane - 1) // lane) * lane
    tile_n = min(max_tile_n, n_128)
    n_pad = ((n + tile_n - 1) // tile_n) * tile_n

    # Transposed, feature-major layout: [8, N_pad] (only ~4x raw x bytes,
    # vs the 64x-inflated [N, 128] padding of the old layout).
    x_t = jnp.zeros((sub, n_pad), jnp.float32).at[:in_f, :n].set(
        x.astype(jnp.float32).T
    )
    w_flat = weight.astype(jnp.float32).reshape(in_f)   # (2,)  -> SMEM
    b_flat = bias.astype(jnp.float32).reshape(out_f)    # (1,)  -> SMEM

    out_pad = pl.pallas_call(
        _make_linear_kernel(in_f),
        out_shape=jax.ShapeDtypeStruct((1, n_pad), jnp.float32),
        grid=(n_pad // tile_n,),
        in_specs=[
            pl.BlockSpec((sub, tile_n), lambda i: (0, i)),
            pl.BlockSpec(memory_space=pltpu.MemorySpace.SMEM),
            pl.BlockSpec(memory_space=pltpu.MemorySpace.SMEM),
        ],
        out_specs=pl.BlockSpec((1, tile_n), lambda i: (0, i)),
        compiler_params=pltpu.CompilerParams(
            dimension_semantics=("parallel",)
        ),
    )(x_t, w_flat, b_flat)

    # Back to [N, 1] (glue only).
    return out_pad[:, :n].T


# ---------------------------------------------------------------------------
# Demo / self-check
# ---------------------------------------------------------------------------
if __name__ == "__main__":
    key = jax.random.PRNGKey(0)
    k_x, k_w, k_b = jax.random.split(key, 3)

    # Deterministic parameter init mimicking nn.Linear(2, 1) defaults:
    # U(-1/sqrt(in_features), 1/sqrt(in_features))
    in_features, out_features = 2, 1
    bound = 1.0 / jnp.sqrt(jnp.float32(in_features))
    weight = jax.random.uniform(
        k_w, (out_features, in_features), jnp.float32, -bound, bound
    )
    bias = jax.random.uniform(k_b, (out_features,), jnp.float32, -bound, bound)

    # Small input batch consistent with the module: [N, 2]
    x = jax.random.normal(k_x, (8, in_features), jnp.float32)

    y = svm_forward(x, weight, bias)
    y = jax.block_until_ready(y)

    # Reference check (plain JAX)
    y_ref = x @ weight.T + bias
    assert y.shape == (8, 1)
    assert jnp.allclose(y, y_ref, atol=1e-5, rtol=1e-5)

    print("KERNEL_OK")
</pallas_src>

<mosaic_0001>
module attributes {stable_mosaic.version = 11 : i64} {
  func.func @_linear_kernel(%arg0: i32, %arg1: memref<8x128xf32, #tpu.memory_space<vmem>>, %arg2: memref<2xf32, #tpu.memory_space<smem>>, %arg3: memref<1xf32, #tpu.memory_space<smem>>, %arg4: memref<1x128xf32, #tpu.memory_space<vmem>>) attributes {dimension_semantics = [#tpu.dimension_semantics<parallel>], iteration_bounds = array<i64: 1>, scalar_prefetch = 0 : i64, scratch_operands = 0 : i64, tpu.core_type = #tpu.core_type<tc>, window_params = [{transform_indices = @transform_0, window_bounds = array<i64: 8, 128>}, {transform_indices = @transform_1, window_bounds = array<i64: 2>}, {transform_indices = @transform_2, window_bounds = array<i64: 1>}, {transform_indices = @transform_3, window_bounds = array<i64: 1, 128>}]} {
    %c0 = arith.constant 0 : index
    %0 = memref.load %arg2[%c0] : memref<2xf32, #tpu.memory_space<smem>>
    %c0_0 = arith.constant 0 : index
    %c0_1 = arith.constant 0 : index
    %1 = vector.load %arg1[%c0_0, %c0_1] : memref<8x128xf32, #tpu.memory_space<vmem>>, vector<1x128xf32>
    %2 = vector.broadcast %0 : f32 to vector<1x128xf32>
    %3 = arith.mulf %2, %1 : vector<1x128xf32>
    %c1 = arith.constant 1 : index
    %4 = memref.load %arg2[%c1] : memref<2xf32, #tpu.memory_space<smem>>
    %c1_2 = arith.constant 1 : index
    %c0_3 = arith.constant 0 : index
    %5 = vector.load %arg1[%c1_2, %c0_3] : memref<8x128xf32, #tpu.memory_space<vmem>>, vector<1x128xf32>
    %6 = vector.broadcast %4 : f32 to vector<1x128xf32>
    %7 = arith.mulf %6, %5 : vector<1x128xf32>
    %8 = arith.addf %3, %7 : vector<1x128xf32>
    %c0_4 = arith.constant 0 : index
    %9 = memref.load %arg3[%c0_4] : memref<1xf32, #tpu.memory_space<smem>>
    %10 = vector.broadcast %9 : f32 to vector<1x128xf32>
    %11 = arith.addf %8, %10 : vector<1x128xf32>
    %c0_5 = arith.constant 0 : index
    %c0_6 = arith.constant 0 : index
    %12 = vector.load %arg4[%c0_5, %c0_6] : memref<1x128xf32, #tpu.memory_space<vmem>>, vector<1x128xf32>
    tpu.vector_store %arg4[%c0_5, %c0_6], %11 {strides = array<i32>} : memref<1x128xf32, #tpu.memory_space<vmem>>, vector<1x128xf32>,
    return
  }
  func.func @transform_0(%arg0: i32) -> (i32, i32) {
    %c0_i32 = arith.constant 0 : i32
    %c0_i32_0 = arith.constant 0 : i32
    return %c0_i32, %arg0 : i32, i32
  }
  func.func @transform_1(%arg0: i32) -> i32 {
    %c0_i32 = arith.constant 0 : i32
    %c0_i32_0 = arith.constant 0 : i32
    return %c0_i32 : i32
  }
  func.func @transform_2(%arg0: i32) -> i32 {
    %c0_i32 = arith.constant 0 : i32
    %c0_i32_0 = arith.constant 0 : i32
    return %c0_i32 : i32
  }
  func.func @transform_3(%arg0: i32) -> (i32, i32) {
    %c0_i32 = arith.constant 0 : i32
    %c0_i32_0 = arith.constant 0 : i32
    return %c0_i32, %arg0 : i32, i32
  }
}

</mosaic_0001>

<llo_original>
// kernel: tpu_custom_call.1
$region0: #{tpu_custom_call.1}
  #allocation0 [shape = 'u32[]', space=smem, size = 0x4, offset = 0x4, fixed_abs, tag = 'smem constant byte address 0x4 - core index']
  #allocation1 [shape = 'u32[144,128]{1,0:T(1,128)}', space=vmem, size = 0x12000, scoped, tag = 'internal scratch']
  #allocation2 [shape = 'f32[1]{0:T(128)S(6)}', space=smem, size = 0x200, scoped, tag = 'scoped memory for tpu_custom_call.1']
  %s0 = inlined_call_operand.hbm [shape: f32[8,128], index: 0, kind: input, shape index: {}]
  %s1 = inlined_call_operand.vmem [shape: f32[2], index: 1, kind: input, shape index: {}]
  %s2 = inlined_call_operand.<no memory space> [shape: f32[1], index: 2, kind: input, shape index: {}]
  %s3 = inlined_call_operand.hbm [shape: f32[1,128], index: 3, kind: output, shape index: {}]
  %s4 = sld [smem:[#allocation0]]
  $region30: #{tpu_custom_call.1} parent=0
    _
  %s6 = ssub.s32 1, %s4
  %s7 = scalar_select 0, %s6, %s4
  %8 = sst [smem:[#allocation2]] %s2
  $region1: #{tpu_custom_call.1} parent=0
    #allocation3 [shape = 'u8[4096]{0}', space=vmem, size = 0x1000, scoped, tag = 'input window, operand 0, single buffered']
    #allocation4 [shape = 's32[1]{0}', space=sflag, size = 0x4, scoped, tag = 'scoped memory for tpu_custom_call.1']
    #allocation5 [shape = 's32[1]{0}', space=sflag, size = 0x4, scoped, tag = 'scoped memory for tpu_custom_call.1']
    #allocation6 [shape = 's32[1]{0}', space=sflag, size = 0x4, scoped, tag = 'scoped memory for tpu_custom_call.1']
    #allocation7 [shape = 'u8[512]{0}', space=smem, size = 0x200, scoped, tag = 'input window, operand 1, single buffered']
    #allocation8 [shape = 'u8[512]{0}', space=vmem, size = 0x400, scoped, tag = 'output window, operand 0, single buffered']
    %9 = vsyncpa [#allocation4], 0
    %10 = vsyncpa [#allocation6], 0
    %11 = vsyncpa [#allocation5], 0
    // Predicated region
    $region2: #{tpu_custom_call.1} parent=1 // pred_check
      _
    $region3: #{tpu_custom_call.1} parent=1 // pred_check_branch
      %13 = sbr.rel (0) target = $region5
    $region4: #{tpu_custom_call.1} parent=1 // pred_region
      %s15 = ssub.s32 128, 128
      %16 = vsyncadd [#allocation4], %s15
      %s18 = sshll.u32 [#allocation3], 4
      %s19 = int_to_ptr.vmem [resolvable:$true] %s18
      %21 = dma.hbm_to_vmem [thread:$0]  %s0, 128, %s19, [#allocation4]
    $region5: #{tpu_custom_call.1} parent=1 // pred_fallthru
      _
    // Predicated region
    $region6: #{tpu_custom_call.1} parent=1 // pred_check
      _
    $region7: #{tpu_custom_call.1} parent=1 // pred_check_branch
      %23 = sbr.rel (0) target = $region9
    $region8: #{tpu_custom_call.1} parent=1 // pred_region
      %s25 = ssub.s32 16, 16
      %26 = vsyncadd [#allocation6], %s25
      %s28 = sshll.u32 %s1, 4
      %s29 = int_to_ptr.vmem [resolvable:$true] %s28
      %31 = dma.vmem_to_smem %s29, 16, [#allocation7], [#allocation6]
    $region9: #{tpu_custom_call.1} parent=1 // pred_fallthru
      _
    // Predicated region
    $region10: #{tpu_custom_call.1} parent=1 // pred_check
      _
    $region11: #{tpu_custom_call.1} parent=1 // pred_check_branch
      %33 = sbr.rel (0) target = $region13
    $region12: #{tpu_custom_call.1} parent=1 // pred_region
      _
    $region13: #{tpu_custom_call.1} parent=1 // pred_fallthru
      _
    // Predicated region
    $region14: #{tpu_custom_call.1} parent=1 // pred_check
      _
    $region15: #{tpu_custom_call.1} parent=1 // pred_check_branch
      %35 = sbr.rel (0) target = $region17
    $region16: #{tpu_custom_call.1} parent=1 // pred_region
      %36 = dma.done [#allocation4], 128
    $region17: #{tpu_custom_call.1} parent=1 // pred_fallthru
      _
    // Predicated region
    $region18: #{tpu_custom_call.1} parent=1 // pred_check
      _
    $region19: #{tpu_custom_call.1} parent=1 // pred_check_branch
      %38 = sbr.rel (0) target = $region21
    $region20: #{tpu_custom_call.1} parent=1 // pred_region
      %39 = dma.done [#allocation6], 16
    $region21: #{tpu_custom_call.1} parent=1 // pred_fallthru
      _
    %40 = sfence
    %s41 = sld [smem:[#allocation7]]
    %v42 = vld [vmem:[#allocation3] sm:$0x1]
    %v43 = vstv %s41
    %v44 = vmul.f32 %v43, %v42
    %s45 = sld [smem:[#allocation7 + $0x1]]
    %v46 = vld [vmem:[#allocation3 + $0x1] sm:$0x1]
    %v47 = vstv %s45
    %v48 = vmul.f32 %v47, %v46
    %v49 = vadd.f32 %v44, %v48
    %s50 = sld [smem:[#allocation2]]
    %v51 = vstv %s50
    %v52 = vadd.f32 %v49, %v51
    %53 = vst [vmem:[#allocation8] sm:$0x1] %v52
    // Predicated region
    $region22: #{tpu_custom_call.1} parent=1 // pred_check
      _
    $region23: #{tpu_custom_call.1} parent=1 // pred_check_branch
      %55 = sbr.rel (0) target = $region25
    $region24: #{tpu_custom_call.1} parent=1 // pred_region
      %s57 = ssub.s32 16, 16
      %58 = vsyncadd [#allocation5], %s57
      %s60 = sshll.u32 [#allocation8], 4
      %s61 = int_to_ptr.vmem [resolvable:$true] %s60
      %63 = dma.vmem_to_hbm [thread:$0]  %s61, 16, %s3, [#allocation5]
    $region25: #{tpu_custom_call.1} parent=1 // pred_fallthru
      _
    // Predicated region
    $region26: #{tpu_custom_call.1} parent=1 // pred_check
      _
    $region27: #{tpu_custom_call.1} parent=1 // pred_check_branch
      %65 = sbr.rel (0) target = $region29
    $region28: #{tpu_custom_call.1} parent=1 // pred_region
      %66 = dma.done [#allocation5], 16
    $region29: #{tpu_custom_call.1} parent=1 // pred_fallthru
      _
    %67 = vsyncpa [#allocation4], 1
    %68 = vsyncpa [#allocation5], 1
    %69 = vsyncpa [#allocation6], 1

</llo_original>
